<compile_context>
chip_gen: v7x
topology: tpu7x:2x2x1
jax: 0.10.0
libtpu: 0.0.40
codegen_flags: <defaults>
</compile_context>

<pallas_src>
import functools

import jax
import jax.numpy as jnp
from jax.experimental import pallas as pl
from jax.experimental.pallas import tpu as pltpu

LANE = 128
NEG_LARGE = -1e30  # bias for padded output columns -> exp() underflows to exactly 0


def _round_up(n, m):
    return ((n + m - 1) // m) * m


# --------------------------------------------------------------------------- #
# Kernel
# --------------------------------------------------------------------------- #
def _mlp_kernel(num_tanh, x_ref, *refs):
    """refs = ([w_i, b_i] * (num_tanh + 1), o_ref).

    Weights are bf16 (MXU operands), biases f32; matmul accumulation in f32.
    The first `num_tanh` layers apply tanh (on a bf16 pre-activation); the last
    layer feeds a row softmax written as a lane-dense bf16 slab.
    """
    # TODO(synk): training-mode dropout (random mask + 1/(1-p) scaling) not implemented.
    o_ref = refs[-1]
    p = refs[:-1]

    h = x_ref[...]  # bf16 (pre-cast in wrapper)

    for li in range(num_tanh):
        w, b = p[2 * li], p[2 * li + 1]
        acc = jnp.dot(h, w[...], preferred_element_type=jnp.float32) + b[...]
        h = jnp.tanh(acc.astype(jnp.bfloat16))  # bf16 tanh; output ready for next MXU op

    wo, bo = p[2 * num_tanh], p[2 * num_tanh + 1]
    logits = jnp.dot(h, wo[...], preferred_element_type=jnp.float32) + bo[...]

    # Row softmax; padded logit columns carry a -1e30 bias so exp() is exactly 0.
    m = jnp.max(logits, axis=1, keepdims=True)
    e = jnp.exp(logits - m)
    denom = jnp.sum(e, axis=1, keepdims=True)
    o_ref[...] = (e * pl.reciprocal(denom, approx=True)).astype(o_ref.dtype)


# --------------------------------------------------------------------------- #
# Parameter preparation
# --------------------------------------------------------------------------- #
def fuse_fc1(params):
    """fc1 has no activation, so fc1 ∘ next-linear is a single linear (exact, f32)."""
    (w1, b1), (w2, b2) = params[0], params[1]
    w_f = w1 @ w2            # (in, h0) @ (h0, h1) -> (in, h1)
    b_f = b1 @ w2 + b2       # (1, h1)
    return [(w_f, b_f)] + list(params[2:])


def pad_and_cast_params(params):
    """Pad feature dims to the 128-lane width; cast weights to bf16.

    params: list of (W (in, out) f32, b (1, out) f32), already fc1-fused.
    The last layer's padded bias columns are -1e30 so the softmax stays exact.
    """
    n = len(params)
    padded = []
    for li, (w, b) in enumerate(params):
        fin, fout = w.shape
        fin_p = fin if li == 0 else _round_up(fin, LANE)  # x feature dim stays unpadded
        fout_p = _round_up(fout, LANE)
        w_p = jnp.zeros((fin_p, fout_p), jnp.float32).at[:fin, :fout].set(w)
        if li == n - 1:
            b_p = jnp.full((1, fout_p), NEG_LARGE, jnp.float32)
        else:
            b_p = jnp.zeros((1, fout_p), jnp.float32)
        b_p = b_p.at[:, :fout].set(b)
        padded.append((w_p.astype(jnp.bfloat16), b_p))
    return padded


# --------------------------------------------------------------------------- #
# Wrapper
# --------------------------------------------------------------------------- #
def _vmem_cap_bytes():
    try:
        cap = int(pltpu.get_tpu_info().vmem_capacity_bytes)
    except Exception:
        cap = 64 << 20  # conservative (v7x per-TC VMEM)
    return int(cap * 0.7)


def _choose_tile_b(batch, tile_b):
    """Multiple-of-8 batch tile; keep >= 2 grid steps when the batch allows."""
    tile_b = _round_up(max(8, int(tile_b)), 8)
    batch8 = _round_up(batch, 8)
    tile_b = min(tile_b, batch8)
    if batch8 > 8:
        half = max(8, _round_up((batch + 1) // 2, 8))
        tile_b = min(tile_b, half)   # grid >= 2 -> both v7x TensorCores get work
    return tile_b


def avax_nn_forward(x, params, *, tile_b=512):
    """x: (batch, input_size) f32; params: list of (W (in, out), b (1, out)) f32."""
    batch, in_dim = x.shape
    out_dim = params[-1][0].shape[1]

    fused = fuse_fc1(params)                 # fc1 folded into the next linear layer
    padded = pad_and_cast_params(fused)
    num_tanh = len(padded) - 1               # all but the last fused layer use tanh
    out_pad = padded[-1][0].shape[1]

    tile_b = _choose_tile_b(batch, tile_b)
    padded_batch = _round_up(batch, tile_b)
    if padded_batch != batch:
        x = jnp.pad(x, ((0, padded_batch - batch), (0, 0)))
    x = x.astype(jnp.bfloat16)               # halve the streamed-input DMA

    flat = []
    for w, b in padded:
        flat += [w, b]

    grid = (padded_batch // tile_b,)

    # x / output are tiled over the batch grid (double-buffered by Pallas);
    # weights & biases are whole-array VMEM residents (no per-step DMA).
    in_specs = [pl.BlockSpec((tile_b, in_dim), lambda i: (i, 0))]
    for _ in flat:
        in_specs.append(pl.BlockSpec(memory_space=pltpu.MemorySpace.VMEM))
    out_specs = pl.BlockSpec((tile_b, out_pad), lambda i: (i, 0))

    # VMEM budget: resident weights + double-buffered bf16 x/out tiles + margin,
    # capped by the generation's physical VMEM.
    weight_bytes = sum(a.size * a.dtype.itemsize for a in flat)
    stream_bytes = 2 * tile_b * in_dim * 2 + 2 * tile_b * out_pad * 2
    vmem_limit = int(min(max(weight_bytes + stream_bytes + (4 << 20), 8 << 20),
                         _vmem_cap_bytes()))

    kernel = functools.partial(_mlp_kernel, num_tanh)

    out = pl.pallas_call(
        kernel,
        out_shape=jax.ShapeDtypeStruct((padded_batch, out_pad), jnp.bfloat16),
        grid=grid,
        in_specs=in_specs,
        out_specs=out_specs,
        compiler_params=pltpu.CompilerParams(
            dimension_semantics=("parallel",),
            vmem_limit_bytes=vmem_limit,
        ),
    )(x, *flat)

    return out[:batch, :out_dim].astype(jnp.float32)


# --------------------------------------------------------------------------- #
# Init & references
# --------------------------------------------------------------------------- #
def init_params(key, input_size, hidden_layers, output_size):
    """Deterministic init mimicking nn.Linear's uniform(-1/sqrt(fan_in), 1/sqrt(fan_in))."""
    sizes = [input_size] + list(hidden_layers) + [output_size]
    params = []
    for i in range(len(sizes) - 1):
        fan_in, fan_out = sizes[i], sizes[i + 1]
        key, kw, kb = jax.random.split(key, 3)
        bound = 1.0 / jnp.sqrt(float(fan_in))
        w = jax.random.uniform(kw, (fan_in, fan_out), jnp.float32, -bound, bound)
        b = jax.random.uniform(kb, (1, fan_out), jnp.float32, -bound, bound)
        params.append((w, b))
    return params


def reference_forward_f32(x, params):
    """Full-precision reference (original unfused f32 params)."""
    h = x @ params[0][0] + params[0][1]
    for w, b in params[1:-1]:
        h = jnp.tanh(h @ w + b)
    logits = h @ params[-1][0] + params[-1][1]
    return jax.nn.softmax(logits, axis=1)


def reference_forward_matched(x, params, out_dim):
    """Reference mirroring the kernel's math: fused fc1, bf16 operands, f32 accum."""
    padded = pad_and_cast_params(fuse_fc1(params))
    bf = jnp.bfloat16
    h = x.astype(bf)
    for w, b in padded[:-1]:
        acc = jnp.dot(h, w, preferred_element_type=jnp.float32) + b
        h = jnp.tanh(acc.astype(bf))
    wo, bo = padded[-1]
    logits = jnp.dot(h, wo, preferred_element_type=jnp.float32) + bo
    p = jax.nn.softmax(logits, axis=1)
    return p.astype(bf).astype(jnp.float32)[:, :out_dim]


# --------------------------------------------------------------------------- #
# Self-test
# --------------------------------------------------------------------------- #
if __name__ == "__main__":
    key = jax.random.PRNGKey(0)

    batch = 256
    input_size = 32
    hidden_layers = [64, 32]
    output_size = 2

    key, kx = jax.random.split(key)
    x = jax.random.normal(kx, (batch, input_size), jnp.float32)
    params = init_params(key, input_size, hidden_layers, output_size)

    out = avax_nn_forward(x, params)
    out = jax.block_until_ready(out)

    assert out.shape == (batch, output_size)

    ref_match = reference_forward_matched(x, params, output_size)
    ref_f32 = reference_forward_f32(x, params)

    assert jnp.allclose(jnp.sum(out, axis=1), 1.0, atol=1e-2), "softmax rows must sum to ~1"
    assert jnp.allclose(out, ref_match, atol=2e-2), "mismatch vs bf16-matched reference"
    assert jnp.allclose(out, ref_f32, atol=5e-2, rtol=5e-2), "mismatch vs f32 reference"

    print("KERNEL_OK")
</pallas_src>

<mosaic_0001>
module attributes {stable_mosaic.version = 11 : i64} {
  func.func @_mlp_kernel(%arg0: i32, %arg1: memref<128x32xbf16, #tpu.memory_space<vmem>>, %arg2: memref<32x128xbf16, #tpu.memory_space<vmem>>, %arg3: memref<1x128xf32, #tpu.memory_space<vmem>>, %arg4: memref<128x128xbf16, #tpu.memory_space<vmem>>, %arg5: memref<1x128xf32, #tpu.memory_space<vmem>>, %arg6: memref<128x128xbf16, #tpu.memory_space<vmem>>) attributes {dimension_semantics = [#tpu.dimension_semantics<parallel>], iteration_bounds = array<i64: 2>, scalar_prefetch = 0 : i64, scratch_operands = 0 : i64, tpu.core_type = #tpu.core_type<tc>, window_params = [{transform_indices = @transform_0, window_bounds = array<i64: 128, 32>}, {pipeline_mode = #tpu.pipeline_mode<synchronous>, transform_indices = @transform_1, window_bounds = array<i64: 32, 128>}, {pipeline_mode = #tpu.pipeline_mode<synchronous>, transform_indices = @transform_2, window_bounds = array<i64: 1, 128>}, {pipeline_mode = #tpu.pipeline_mode<synchronous>, transform_indices = @transform_3, window_bounds = array<i64: 128, 128>}, {pipeline_mode = #tpu.pipeline_mode<synchronous>, transform_indices = @transform_4, window_bounds = array<i64: 1, 128>}, {transform_indices = @transform_5, window_bounds = array<i64: 128, 128>}]} {
    %c0 = arith.constant 0 : index
    %c0_0 = arith.constant 0 : index
    %0 = vector.load %arg1[%c0, %c0_0] : memref<128x32xbf16, #tpu.memory_space<vmem>>, vector<128x32xbf16>
    %c0_1 = arith.constant 0 : index
    %c0_2 = arith.constant 0 : index
    %1 = vector.load %arg2[%c0_1, %c0_2] : memref<32x128xbf16, #tpu.memory_space<vmem>>, vector<32x128xbf16>
    %cst = arith.constant dense<0.000000e+00> : vector<128x128xf32>
    %2 = tpu.matmul %0, %1, %cst {dimension_numbers = #tpu.dot_dimension_numbers<[1], [0], [0], [1], [0, 0, 1, 1], [], []>} : vector<128x32xbf16>, vector<32x128xbf16>, vector<128x128xf32> -> vector<128x128xf32>
    %c0_3 = arith.constant 0 : index
    %c0_4 = arith.constant 0 : index
    %3 = vector.load %arg3[%c0_3, %c0_4] : memref<1x128xf32, #tpu.memory_space<vmem>>, vector<1x128xf32>
    %4 = vector.broadcast %3 : vector<1x128xf32> to vector<128x128xf32>
    %5 = arith.addf %2, %4 : vector<128x128xf32>
    %6 = arith.truncf %5 : vector<128x128xf32> to vector<128x128xbf16>
    %7 = math.tanh %6 : vector<128x128xbf16>
    %c0_5 = arith.constant 0 : index
    %c0_6 = arith.constant 0 : index
    %8 = vector.load %arg4[%c0_5, %c0_6] : memref<128x128xbf16, #tpu.memory_space<vmem>>, vector<128x128xbf16>
    %cst_7 = arith.constant dense<0.000000e+00> : vector<128x128xf32>
    %9 = tpu.matmul %7, %8, %cst_7 {dimension_numbers = #tpu.dot_dimension_numbers<[1], [0], [0], [1], [0, 0, 1, 1], [], []>} : vector<128x128xbf16>, vector<128x128xbf16>, vector<128x128xf32> -> vector<128x128xf32>
    %c0_8 = arith.constant 0 : index
    %c0_9 = arith.constant 0 : index
    %10 = vector.load %arg5[%c0_8, %c0_9] : memref<1x128xf32, #tpu.memory_space<vmem>>, vector<1x128xf32>
    %11 = vector.broadcast %10 : vector<1x128xf32> to vector<128x128xf32>
    %12 = arith.addf %9, %11 : vector<128x128xf32>
    %cst_10 = arith.constant dense<0xFF800000> : vector<128xf32>
    %13 = vector.multi_reduction <maximumf>, %12, %cst_10 [1] : vector<128x128xf32> to vector<128xf32>
    %14 = vector.shape_cast %13 : vector<128xf32> to vector<128x1xf32>
    %15 = vector.broadcast %14 : vector<128x1xf32> to vector<128x128xf32>
    %16 = arith.subf %12, %15 : vector<128x128xf32>
    %17 = math.exp %16 : vector<128x128xf32>
    %cst_11 = arith.constant dense<0.000000e+00> : vector<128xf32>
    %18 = vector.multi_reduction <add>, %17, %cst_11 [1] : vector<128x128xf32> to vector<128xf32>
    %19 = vector.shape_cast %18 : vector<128xf32> to vector<128x1xf32>
    %20 = tpu.reciprocal %19 {approx = true} : vector<128x1xf32> -> vector<128x1xf32>
    %21 = vector.broadcast %20 : vector<128x1xf32> to vector<128x128xf32>
    %22 = arith.mulf %17, %21 : vector<128x128xf32>
    %23 = arith.truncf %22 : vector<128x128xf32> to vector<128x128xbf16>
    %c0_12 = arith.constant 0 : index
    %c0_13 = arith.constant 0 : index
    %24 = vector.load %arg6[%c0_12, %c0_13] : memref<128x128xbf16, #tpu.memory_space<vmem>>, vector<128x128xbf16>
    tpu.vector_store %arg6[%c0_12, %c0_13], %23 {strides = array<i32>} : memref<128x128xbf16, #tpu.memory_space<vmem>>, vector<128x128xbf16>,
    return
  }
  func.func @transform_0(%arg0: i32) -> (i32, i32) {
    %c0_i32 = arith.constant 0 : i32
    %c0_i32_0 = arith.constant 0 : i32
    return %arg0, %c0_i32 : i32, i32
  }
  func.func @transform_1(%arg0: i32) -> (i32, i32) {
    %c0_i32 = arith.constant 0 : i32
    %c0_i32_0 = arith.constant 0 : i32
    %c0_i32_1 = arith.constant 0 : i32
    return %c0_i32, %c0_i32_0 : i32, i32
  }
  func.func @transform_2(%arg0: i32) -> (i32, i32) {
    %c0_i32 = arith.constant 0 : i32
    %c0_i32_0 = arith.constant 0 : i32
    %c0_i32_1 = arith.constant 0 : i32
    return %c0_i32, %c0_i32_0 : i32, i32
  }
  func.func @transform_3(%arg0: i32) -> (i32, i32) {
    %c0_i32 = arith.constant 0 : i32
    %c0_i32_0 = arith.constant 0 : i32
    %c0_i32_1 = arith.constant 0 : i32
    return %c0_i32, %c0_i32_0 : i32, i32
  }
  func.func @transform_4(%arg0: i32) -> (i32, i32) {
    %c0_i32 = arith.constant 0 : i32
    %c0_i32_0 = arith.constant 0 : i32
    %c0_i32_1 = arith.constant 0 : i32
    return %c0_i32, %c0_i32_0 : i32, i32
  }
  func.func @transform_5(%arg0: i32) -> (i32, i32) {
    %c0_i32 = arith.constant 0 : i32
    %c0_i32_0 = arith.constant 0 : i32
    return %arg0, %c0_i32 : i32, i32
  }
}

</mosaic_0001>

<llo_original>
// kernel: tpu_custom_call.1
$region0: #{tpu_custom_call.1}
  #allocation0 [shape = 'u32[]', space=smem, size = 0x4, offset = 0x4, fixed_abs, tag = 'smem constant byte address 0x4 - core index']
  #allocation1 [shape = 'u32[144,128]{1,0:T(1,128)}', space=vmem, size = 0x12000, scoped, tag = 'internal scratch']
  %s0 = inlined_call_operand.vmem [shape: bf16[256,32], index: 0, kind: input, shape index: {}]
  %s1 = inlined_call_operand.vmem [shape: bf16[32,128], index: 1, kind: input, shape index: {}]
  %s2 = inlined_call_operand.vmem [shape: f32[1,128], index: 2, kind: input, shape index: {}]
  %s3 = inlined_call_operand.vmem [shape: bf16[128,128], index: 3, kind: input, shape index: {}]
  %s4 = inlined_call_operand.vmem [shape: f32[1,128], index: 4, kind: input, shape index: {}]
  %s5 = inlined_call_operand.hbm [shape: bf16[256,128], index: 5, kind: output, shape index: {}]
  %s6 = sld [smem:[#allocation0]]
  $region53: #{tpu_custom_call.1} parent=0
    _
  %s8 = ssub.s32 1, %s6
  %s9 = scalar_select 0, %s8, %s6
  $region1: #{tpu_custom_call.1} parent=0
    #allocation2 [shape = 'u8[65536]{0}', space=vmem, size = 0x10000, scoped, tag = 'output window, operand 0']
    #allocation3 [shape = 's32[2]{0}', space=sflag, size = 0x8, scoped, tag = 'scoped memory for tpu_custom_call.1']
    %10 = vsyncpa [#allocation3], 0
    %s11 = scalar_lea.sflag [#allocation3], 1
    %12 = vsyncpa %s11, 0
    loop: start=0, step=1, limit=4
    $region2: #{tpu_custom_call.1} parent=1 // loop_pre_header
      _
    $region3: #{tpu_custom_call.1} parent=1 // loop_header
      %s14 = sphi 0, %s18
      %p15 = scmp.ge.s32.totalorder %s14, 4
      %s24 = sphi 0, %s26
      %s27 = sphi 0, %s24
      %s28 = sphi 0, %s27
      %s44 = sphi 0, %s28
      %s48 = sphi 0, %s48
      %s50 = sphi 0, %s48
      %s51 = sphi 0, %s50
      %s65 = sphi 0, %s51
      %s69 = sphi 0, %s69
      %s71 = sphi 0, %s69
      %s72 = sphi 0, %s71
      %s86 = sphi 0, %s72
      %s90 = sphi 0, %s90
      %s92 = sphi 0, %s90
      %s93 = sphi 0, %s92
      %s107 = sphi 0, %s93
      %s111 = sphi 0, %s111
      %s113 = sphi 0, %s111
      %s114 = sphi 0, %s113
      %s128 = sphi 0, %s114
      %s134 = sphi 0, %s136
      %s137 = sphi 0, %s134
      %s138 = sphi 0, %s137
      %s154 = sphi 0, %s138
    $region4: #{tpu_custom_call.1} parent=1 // loop_header_branch
      %17 = sbr.rel (%p15) target = $region8
    $region5: #{tpu_custom_call.1} parent=1 // loop_body
      %s19 = ssub.s32 %s14, 1
      %s20 = ssub.s32 %s14, 2
      %s21 = sadd.s32 %s14, 1
      %s22 = ssub.s32 %s14, %s21
      %p23 = scmp.eq.s32.totalorder %s22, 0
      %s25 = sadd.s32 %s24, 1
      %s26 = scalar_select %p23, %s24, %s25
      %p29 = pneg %p23
      %p30 = scmp.eq.s32.totalorder %s14, 1
      %p31 = por %p29, %p30
      %p32 = scmp.ne.s32.totalorder %s24, %s27
      %p33 = scmp.eq.s32.totalorder %s14, 0
      %p34 = por %p32, %p33
      %p35 = scmp.ne.s32.totalorder %s24, %s27
      %p36 = scmp.eq.s32.totalorder %s19, 1
      %p37 = por %p35, %p36
      %p38 = scmp.ne.s32.totalorder %s27, %s28
      %p39 = scmp.eq.s32.totalorder %s19, 0
      %p40 = por %p38, %p39
      %p41 = scmp.ne.s32.totalorder %s27, %s28
      %p42 = scmp.eq.s32.totalorder %s20, 1
      %p43 = por %p41, %p42
      %p45 = scmp.ne.s32.totalorder %s28, %s44
      %p46 = scmp.eq.s32.totalorder %s20, 0
      %p47 = por %p45, %p46
      %s49 = sadd.s32 %s48, 1
      %p52 = scmp.eq.s32.totalorder %s14, 1
      %p53 = scmp.ne.s32.totalorder %s48, %s50
      %p54 = scmp.eq.s32.totalorder %s14, 0
      %p55 = por %p53, %p54
      %p56 = scmp.ne.s32.totalorder %s48, %s50
      %p57 = scmp.eq.s32.totalorder %s19, 1
      %p58 = por %p56, %p57
      %p59 = scmp.ne.s32.totalorder %s50, %s51
      %p60 = scmp.eq.s32.totalorder %s19, 0
      %p61 = por %p59, %p60
      %p62 = scmp.ne.s32.totalorder %s50, %s51
      %p63 = scmp.eq.s32.totalorder %s20, 1
      %p64 = por %p62, %p63
      %p66 = scmp.ne.s32.totalorder %s51, %s65
      %p67 = scmp.eq.s32.totalorder %s20, 0
      %p68 = por %p66, %p67
      %s70 = sadd.s32 %s69, 1
      %p73 = scmp.eq.s32.totalorder %s14, 1
      %p74 = scmp.ne.s32.totalorder %s69, %s71
      %p75 = scmp.eq.s32.totalorder %s14, 0
      %p76 = por %p74, %p75
      %p77 = scmp.ne.s32.totalorder %s69, %s71
      %p78 = scmp.eq.s32.totalorder %s19, 1
      %p79 = por %p77, %p78
      %p80 = scmp.ne.s32.totalorder %s71, %s72
      %p81 = scmp.eq.s32.totalorder %s19, 0
      %p82 = por %p80, %p81
      %p83 = scmp.ne.s32.totalorder %s71, %s72
      %p84 = scmp.eq.s32.totalorder %s20, 1
      %p85 = por %p83, %p84
      %p87 = scmp.ne.s32.totalorder %s72, %s86
      %p88 = scmp.eq.s32.totalorder %s20, 0
      %p89 = por %p87, %p88
      %s91 = sadd.s32 %s90, 1
      %p94 = scmp.eq.s32.totalorder %s14, 1
      %p95 = scmp.ne.s32.totalorder %s90, %s92
      %p96 = scmp.eq.s32.totalorder %s14, 0
      %p97 = por %p95, %p96
      %p98 = scmp.ne.s32.totalorder %s90, %s92
      %p99 = scmp.eq.s32.totalorder %s19, 1
      %p100 = por %p98, %p99
      %p101 = scmp.ne.s32.totalorder %s92, %s93
      %p102 = scmp.eq.s32.totalorder %s19, 0
      %p103 = por %p101, %p102
      %p104 = scmp.ne.s32.totalorder %s92, %s93
      %p105 = scmp.eq.s32.totalorder %s20, 1
      %p106 = por %p104, %p105
      %p108 = scmp.ne.s32.totalorder %s93, %s107
      %p109 = scmp.eq.s32.totalorder %s20, 0
      %p110 = por %p108, %p109
      %s112 = sadd.s32 %s111, 1
      %p115 = scmp.eq.s32.totalorder %s14, 1
      %p116 = scmp.ne.s32.totalorder %s111, %s113
      %p117 = scmp.eq.s32.totalorder %s14, 0
      %p118 = por %p116, %p117
      %p119 = scmp.ne.s32.totalorder %s111, %s113
      %p120 = scmp.eq.s32.totalorder %s19, 1
      %p121 = por %p119, %p120
      %p122 = scmp.ne.s32.totalorder %s113, %s114
      %p123 = scmp.eq.s32.totalorder %s19, 0
      %p124 = por %p122, %p123
      %p125 = scmp.ne.s32.totalorder %s113, %s114
      %p126 = scmp.eq.s32.totalorder %s20, 1
      %p127 = por %p125, %p126
      %p129 = scmp.ne.s32.totalorder %s114, %s128
      %p130 = scmp.eq.s32.totalorder %s20, 0
      %p131 = por %p129, %p130
      %s132 = ssub.s32 %s14, %s21
      %p133 = scmp.eq.s32.totalorder %s132, 0
      %s135 = sadd.s32 %s134, 1
      %s136 = scalar_select %p133, %s134, %s135
      %p139 = pneg %p133
      %p140 = scmp.eq.s32.totalorder %s14, 1
      %p141 = por %p139, %p140
      %p142 = scmp.ne.s32.totalorder %s134, %s137
      %p143 = scmp.eq.s32.totalorder %s14, 0
      %p144 = por %p142, %p143
      %p145 = scmp.ne.s32.totalorder %s134, %s137
      %p146 = scmp.eq.s32.totalorder %s19, 1
      %p147 = por %p145, %p146
      %p148 = scmp.ne.s32.totalorder %s137, %s138
      %p149 = scmp.eq.s32.totalorder %s19, 0
      %p150 = por %p148, %p149
      %p151 = scmp.ne.s32.totalorder %s137, %s138
      %p152 = scmp.eq.s32.totalorder %s20, 1
      %p153 = por %p151, %p152
      %p155 = scmp.ne.s32.totalorder %s138, %s154
      %p156 = scmp.eq.s32.totalorder %s20, 0
      %p157 = por %p155, %p156
      %p158 = scmp.le.s32.totalorder 1, %s14
      %p159 = scmp.lt.s32.totalorder %s14, 3
      %p160 = pnand %p158, %p159
      %p161 = pneg %p160
      // Predicated region
      $region9: #{tpu_custom_call.1} parent=5 // pred_check
        _
      $region10: #{tpu_custom_call.1} parent=5 // pred_check_branch
        %163 = sbr.rel (%p160) target = $region12
      $region11: #{tpu_custom_call.1} parent=5 // pred_region
        %s164 = ssub.s32 %s14, 1
        // Predicated region
        $region13: #{tpu_custom_call.1} parent=11 // pred_check
          %p165 = pneg %p61
        $region14: #{tpu_custom_call.1} parent=11 // pred_check_branch
          %167 = sbr.rel (%p165) target = $region16
        $region15: #{tpu_custom_call.1} parent=11 // pred_region
          _
        $region16: #{tpu_custom_call.1} parent=11 // pred_fallthru
          _
        // Predicated region
        $region17: #{tpu_custom_call.1} parent=11 // pred_check
          %p168 = pneg %p82
        $region18: #{tpu_custom_call.1} parent=11 // pred_check_branch
          %170 = sbr.rel (%p168) target = $region20
        $region19: #{tpu_custom_call.1} parent=11 // pred_region
          _
        $region20: #{tpu_custom_call.1} parent=11 // pred_fallthru
          _
        // Predicated region
        $region21: #{tpu_custom_call.1} parent=11 // pred_check
          %p171 = pneg %p103
        $region22: #{tpu_custom_call.1} parent=11 // pred_check_branch
          %173 = sbr.rel (%p171) target = $region24
        $region23: #{tpu_custom_call.1} parent=11 // pred_region
          _
        $region24: #{tpu_custom_call.1} parent=11 // pred_fallthru
          _
        // Predicated region
        $region25: #{tpu_custom_call.1} parent=11 // pred_check
          %p174 = pneg %p124
        $region26: #{tpu_custom_call.1} parent=11 // pred_check_branch
          %176 = sbr.rel (%p174) target = $region28
        $region27: #{tpu_custom_call.1} parent=11 // pred_region
          _
        $region28: #{tpu_custom_call.1} parent=11 // pred_fallthru
          _
      $region12: #{tpu_custom_call.1} parent=5 // pred_fallthru
        _
      %p177 = scmp.lt.s32.totalorder %s14, 2
      // Predicated region
      $region29: #{tpu_custom_call.1} parent=5 // pred_check
        %p178 = pneg %p177
      $region30: #{tpu_custom_call.1} parent=5 // pred_check_branch
        %180 = sbr.rel (%p178) target = $region32
      $region31: #{tpu_custom_call.1} parent=5 // pred_region
        // Predicated region
        $region33: #{tpu_custom_call.1} parent=31 // pred_check
          %p181 = pneg %p34
        $region34: #{tpu_custom_call.1} parent=31 // pred_check_branch
          %183 = sbr.rel (%p181) target = $region36
        $region35: #{tpu_custom_call.1} parent=31 // pred_region
          %s184 = smul.u32 16, %s14
          %p185 = scmp.lt.s32.totalorder %s184, 31
          %s186 = scalar_select %p185, %s184, 31
          %s187 = smul.addr %s186, 4
          %s188 = scalar_lea.vmem %s0, %s187
          %s189 = smul.u32 16, %s14
        $region36: #{tpu_custom_call.1} parent=31 // pred_fallthru
          _
      $region32: #{tpu_custom_call.1} parent=5 // pred_fallthru
        _
      %p190 = scmp.le.s32.totalorder 1, %s14
      %p191 = scmp.lt.s32.totalorder %s14, 3
      %p192 = pnand %p190, %p191
      %p193 = pneg %p192
      // Predicated region
      $region37: #{tpu_custom_call.1} parent=5 // pred_check
        _
      $region38: #{tpu_custom_call.1} parent=5 // pred_check_branch
        %195 = sbr.rel (%p192) target = $region40
      $region39: #{tpu_custom_call.1} parent=5 // pred_region
        %s196 = ssub.s32 %s14, 1
        %s197 = smul.u32 16, %s19
        %p198 = scmp.lt.s32.totalorder %s197, 31
        %s199 = scalar_select %p198, %s197, 31
        %s200 = smul.addr %s199, 4
        %s201 = scalar_lea.vmem %s0, %s200
        %p202 = pneg %p40
        %p203 = pneg %p37
        %p204 = pneg %p61
        %p205 = pneg %p58
        %p206 = pneg %p82
        %p207 = pneg %p79
        %p208 = pneg %p103
        %p209 = pneg %p100
        %p210 = pneg %p124
        %p211 = pneg %p121
        %p212 = pneg %p150
        %p213 = pneg %p147
        %s214 = sand.u32 %s137, 1
        %s215 = scalar_lea.sflag [#allocation3], %s214
        %s216 = sand.u32 %s137, 1
        %s217 = smul.addr %s216, 64
        %s218 = scalar_lea.vmem [#allocation2], %s217
        %s219 = smul.u32 16, %s19
        %p220 = scmp.lt.s32.totalorder %s219, 31
        %s221 = scalar_select %p220, %s219, 31
        %s222 = smul.addr %s221, 4
        %s223 = scalar_lea.vmem %s0, %s222
        %s224 = smul.u32 16, %s19
        %s225 = smul.u32 16, %s19
        %v227 = vld [vmem:[%s223] sm:$0xf]
        %v228 = vld [vmem:[%s223 + $0x4] sm:$0xf]
        %v229 = vld [vmem:[%s223 + $0x8] sm:$0xf]
        %v230 = vld [vmem:[%s223 + $0xc] sm:$0xf]
        %v231 = vld [vmem:[%s223 + $0x10] sm:$0xf]
        %v232 = vld [vmem:[%s223 + $0x14] sm:$0xf]
        %v233 = vld [vmem:[%s223 + $0x18] sm:$0xf]
        %v234 = vld [vmem:[%s223 + $0x1c] sm:$0xf]
        %v235 = vld [vmem:[%s223 + $0x20] sm:$0xf]
        %v236 = vld [vmem:[%s223 + $0x24] sm:$0xf]
        %v237 = vld [vmem:[%s223 + $0x28] sm:$0xf]
        %v238 = vld [vmem:[%s223 + $0x2c] sm:$0xf]
        %v239 = vld [vmem:[%s223 + $0x30] sm:$0xf]
        %v240 = vld [vmem:[%s223 + $0x34] sm:$0xf]
        %v241 = vld [vmem:[%s223 + $0x38] sm:$0xf]
        %v242 = vld [vmem:[%s223 + $0x3c] sm:$0xf]
        %v243 = vld [vmem:[%s1] sm:$0xf]
        %v244 = vld [vmem:[%s1 + $0x4] sm:$0xf]
        %v245 = vld [vmem:[%s1 + $0x8] sm:$0xf]
        %v246 = vld [vmem:[%s1 + $0xc] sm:$0xf]
        %v247 = vld [vmem:[%s2] sm:$0x1]
        %v249 = vlaneseq
        %v250 = vshrl.u32 %v249, 7
        %v251 = vsub.s32 0, %v250
        %v252 = vrot.slane %v247, %v251
        %v270 = vunpack.c.l.b16 %v227
        %v271 = vunpack.c.l.b16 %v228
        %v272 = vunpack.c.l.b16 %v229
        %v273 = vunpack.c.l.b16 %v230
        %v274 = vunpack.c.l.b16 %v231
        %v275 = vunpack.c.l.b16 %v232
        %v276 = vunpack.c.l.b16 %v233
        %v277 = vunpack.c.l.b16 %v234
        %v278 = vunpack.c.l.b16 %v235
        %v279 = vunpack.c.l.b16 %v236
        %v280 = vunpack.c.l.b16 %v237
        %v281 = vunpack.c.l.b16 %v238
        %v282 = vunpack.c.l.b16 %v239
        %v283 = vunpack.c.l.b16 %v240
        %v284 = vunpack.c.l.b16 %v241
        %v285 = vunpack.c.l.b16 %v242
        %v286 = vpack.c.b16 %v271, %v270
        %v287 = vpack.c.b16 %v273, %v272
        %v288 = vpack.c.b16 %v275, %v274
        %v289 = vpack.c.b16 %v277, %v276
        %v290 = vpack.c.b16 %v279, %v278
        %v291 = vpack.c.b16 %v281, %v280
        %v292 = vpack.c.b16 %v283, %v282
        %v293 = vpack.c.b16 %v285, %v284
        %v298 = vunpack.c.l.b16 %v243
        %v299 = vunpack.c.l.b16 %v244
        %v300 = vunpack.c.l.b16 %v245
        %v301 = vunpack.c.l.b16 %v246
        %v302 = vpack.c.b16 %v299, %v298
        %v303 = vpack.c.b16 %v301, %v300
        %vm306 = vcmask 261120
        %v308 = vsel %vm306, %v286, 0
        %v311 = vsel %vm306, %v287, 0
        %v314 = vsel %vm306, %v288, 0
        %v317 = vsel %vm306, %v289, 0
        %v320 = vsel %vm306, %v290, 0
        %v323 = vsel %vm306, %v291, 0
        %v326 = vsel %vm306, %v292, 0
        %v329 = vsel %vm306, %v293, 0
        %331 = vmatprep.subr.bf16.mxu0 0
        %332 = vmatpush1.bf16.msra.mxu0 %v302
        %333 = vmatprep.subr.bf16.mxu0 0
        %334 = vmatpush1.bf16.msra.mxu0 %v303
        %335 = vmatprep.subr.bf16.mxu0 0
        %336 = vmatpush1.bf16.msra.mxu0 0
        %337 = vmatprep.subr.bf16.mxu0 0
        %338 = vmatpush1.bf16.msra.mxu0 0
        %339 = vmatprep.subr.bf16.mxu0 0
        %340 = vmatpush1.bf16.msra.mxu0 0
        %341 = vmatprep.subr.bf16.mxu0 0
        %342 = vmatpush1.bf16.msra.mxu0 0
        %343 = vmatprep.subr.bf16.mxu0 0
        %344 = vmatpush1.bf16.msra.mxu0 0
        %345 = vmatprep.subr.bf16.mxu0 0
        %346 = vmatpush1.bf16.msra.mxu0 0
        %347 = vmatprep.subr.bf16.mxu0 0
        %348 = vmatpush1.bf16.msra.mxu0 0
        %349 = vmatprep.subr.bf16.mxu0 0
        %350 = vmatpush1.bf16.msra.mxu0 0
        %351 = vmatprep.subr.bf16.mxu0 0
        %352 = vmatpush1.bf16.msra.mxu0 0
        %353 = vmatprep.subr.bf16.mxu0 0
        %354 = vmatpush1.bf16.msra.mxu0 0
        %355 = vmatprep.subr.bf16.mxu0 0
        %356 = vmatpush1.bf16.msra.mxu0 0
        %357 = vmatprep.subr.bf16.mxu0 0
        %358 = vmatpush1.bf16.msra.mxu0 0
        %359 = vmatprep.subr.bf16.mxu0 0
        %360 = vmatpush1.bf16.msra.mxu0 0
        %361 = vmatprep.subr.bf16.mxu0 0
        %362 = vmatpush1.bf16.msra.mxu0 0
        %363 = vmatprep.mubr.bf16.mxu0 0
        %364 = vmatmul.mubr.bf16.gmra.mrb[0].mxu0 %v308
        %v365 = vpop.f32.mrb[0].mxu0
        %v366 = vadd.f32 %v252, %v365
        %v367 = vpop.f32.mrb[0].mxu0
        %v368 = vpop.f32.mrb[0].mxu0
        %v369 = vadd.f32 %v252, %v368
        %v370 = vpop.f32.mrb[0].mxu0
        %371 = vmatprep.mubr.bf16.mxu0 0
        %372 = vmatmul.mubr.bf16.gmra.mrb[0].mxu0 %v311
        %v373 = vpop.f32.mrb[0].mxu0
        %v374 = vadd.f32 %v252, %v373
        %v375 = vpop.f32.mrb[0].mxu0
        %v376 = vpop.f32.mrb[0].mxu0
        %v377 = vadd.f32 %v252, %v376
        %v378 = vpop.f32.mrb[0].mxu0
        %379 = vmatprep.mubr.bf16.mxu0 0
        %380 = vmatmul.mubr.bf16.gmra.mrb[0].mxu0 %v314
        %v381 = vpop.f32.mrb[0].mxu0
        %v382 = vadd.f32 %v252, %v381
        %v383 = vpop.f32.mrb[0].mxu0
        %v384 = vpop.f32.mrb[0].mxu0
        %v385 = vadd.f32 %v252, %v384
        %v386 = vpop.f32.mrb[0].mxu0
        %387 = vmatprep.mubr.bf16.mxu0 0
        %388 = vmatmul.mubr.bf16.gmra.mrb[0].mxu0 %v317
        %v389 = vpop.f32.mrb[0].mxu0
        %v390 = vadd.f32 %v252, %v389
        %v391 = vpop.f32.mrb[0].mxu0
        %v392 = vpop.f32.mrb[0].mxu0
        %v393 = vadd.f32 %v252, %v392
        %v394 = vpop.f32.mrb[0].mxu0
        %395 = vmatprep.mubr.bf16.mxu0 0
        %396 = vmatmul.mubr.bf16.gmra.mrb[0].mxu0 %v320
        %v397 = vpop.f32.mrb[0].mxu0
        %v398 = vadd.f32 %v252, %v397
        %v399 = vpop.f32.mrb[0].mxu0
        %v400 = vpop.f32.mrb[0].mxu0
        %v401 = vadd.f32 %v252, %v400
        %v402 = vpop.f32.mrb[0].mxu0
        %403 = vmatprep.mubr.bf16.mxu0 0
        %404 = vmatmul.mubr.bf16.gmra.mrb[0].mxu0 %v323
        %v405 = vpop.f32.mrb[0].mxu0
        %v406 = vadd.f32 %v252, %v405
        %v407 = vpop.f32.mrb[0].mxu0
        %v408 = vpop.f32.mrb[0].mxu0
        %v409 = vadd.f32 %v252, %v408
        %v410 = vpop.f32.mrb[0].mxu0
        %411 = vmatprep.mubr.bf16.mxu0 0
        %412 = vmatmul.mubr.bf16.gmra.mrb[0].mxu0 %v326
        %v413 = vpop.f32.mrb[0].mxu0
        %v414 = vadd.f32 %v252, %v413
        %v415 = vpop.f32.mrb[0].mxu0
        %v416 = vpop.f32.mrb[0].mxu0
        %v417 = vadd.f32 %v252, %v416
        %v418 = vpop.f32.mrb[0].mxu0
        %419 = vmatprep.mubr.bf16.mxu0 0
        %420 = vmatmul.mubr.bf16.gmra.mrb[0].mxu0 %v329
        %v421 = vpop.f32.mrb[0].mxu0
        %v422 = vadd.f32 %v252, %v421
        %v423 = vpop.f32.mrb[0].mxu0
        %v424 = vpop.f32.mrb[0].mxu0
        %v425 = vadd.f32 %v252, %v424
        %v426 = vpop.f32.mrb[0].mxu0
        %427 = vdwg.mxu0
        %v428 = vpack.c.bf16 %v369, %v366
        %v429 = vpack.c.bf16 %v377, %v374
        %v430 = vpack.c.bf16 %v385, %v382
        %v431 = vpack.c.bf16 %v393, %v390
        %v432 = vpack.c.bf16 %v401, %v398
        %v433 = vpack.c.bf16 %v409, %v406
        %v434 = vpack.c.bf16 %v417, %v414
        %v435 = vpack.c.bf16 %v425, %v422
        %v436 = vtanh.bf16.pop %v428
        %v437 = vtanh.bf16.pop %v429
        %v438 = vtanh.bf16.pop %v430
        %v439 = vtanh.bf16.pop %v431
        %v440 = vtanh.bf16.pop %v432
        %v441 = vtanh.bf16.pop %v433
        %v442 = vtanh.bf16.pop %v434
        %v443 = vtanh.bf16.pop %v435
        %v444 = vld [vmem:[%s3] sm:$0xf]
        %v445 = vld [vmem:[%s3 + $0x4] sm:$0xf]
        %v446 = vld [vmem:[%s3 + $0x8] sm:$0xf]
        %v447 = vld [vmem:[%s3 + $0xc] sm:$0xf]
        %v448 = vld [vmem:[%s3 + $0x10] sm:$0xf]
        %v449 = vld [vmem:[%s3 + $0x14] sm:$0xf]
        %v450 = vld [vmem:[%s3 + $0x18] sm:$0xf]
        %v451 = vld [vmem:[%s3 + $0x1c] sm:$0xf]
        %v452 = vld [vmem:[%s3 + $0x20] sm:$0xf]
        %v453 = vld [vmem:[%s3 + $0x24] sm:$0xf]
        %v454 = vld [vmem:[%s3 + $0x28] sm:$0xf]
        %v455 = vld [vmem:[%s3 + $0x2c] sm:$0xf]
        %v456 = vld [vmem:[%s3 + $0x30] sm:$0xf]
        %v457 = vld [vmem:[%s3 + $0x34] sm:$0xf]
        %v458 = vld [vmem:[%s3 + $0x38] sm:$0xf]
        %v459 = vld [vmem:[%s3 + $0x3c] sm:$0xf]
        %v460 = vld [vmem:[%s4] sm:$0x1]
        %v462 = vlaneseq
        %v463 = vshrl.u32 %v462, 7
        %v464 = vsub.s32 0, %v463
        %v465 = vrot.slane %v460, %v464
        %v483 = vunpack.c.l.b16 %v444
        %v484 = vunpack.c.l.b16 %v445
        %v485 = vunpack.c.l.b16 %v446
        %v486 = vunpack.c.l.b16 %v447
        %v487 = vunpack.c.l.b16 %v448
        %v488 = vunpack.c.l.b16 %v449
        %v489 = vunpack.c.l.b16 %v450
        %v490 = vunpack.c.l.b16 %v451
        %v491 = vunpack.c.l.b16 %v452
        %v492 = vunpack.c.l.b16 %v453
        %v493 = vunpack.c.l.b16 %v454
        %v494 = vunpack.c.l.b16 %v455
        %v495 = vunpack.c.l.b16 %v456
        %v496 = vunpack.c.l.b16 %v457
        %v497 = vunpack.c.l.b16 %v458
        %v498 = vunpack.c.l.b16 %v459
        %v499 = vpack.c.b16 %v484, %v483
        %v500 = vpack.c.b16 %v486, %v485
        %v501 = vpack.c.b16 %v488, %v487
        %v502 = vpack.c.b16 %v490, %v489
        %v503 = vpack.c.b16 %v492, %v491
        %v504 = vpack.c.b16 %v494, %v493
        %v505 = vpack.c.b16 %v496, %v495
        %v506 = vpack.c.b16 %v498, %v497
        %515 = vmatprep.subr.bf16.mxu0 0
        %516 = vmatpush1.bf16.msra.mxu0 %v499
        %517 = vmatprep.subr.bf16.mxu0 0
        %518 = vmatpush1.bf16.msra.mxu0 %v500
        %519 = vmatprep.subr.bf16.mxu0 0
        %520 = vmatpush1.bf16.msra.mxu0 %v501
        %521 = vmatprep.subr.bf16.mxu0 0
        %522 = vmatpush1.bf16.msra.mxu0 %v502
        %523 = vmatprep.subr.bf16.mxu0 0
        %524 = vmatpush1.bf16.msra.mxu0 %v503
        %525 = vmatprep.subr.bf16.mxu0 0
        %526 = vmatpush1.bf16.msra.mxu0 %v504
        %527 = vmatprep.subr.bf16.mxu0 0
        %528 = vmatpush1.bf16.msra.mxu0 %v505
        %529 = vmatprep.subr.bf16.mxu0 0
        %530 = vmatpush1.bf16.msra.mxu0 %v506
        %531 = vmatprep.subr.bf16.mxu0 0
        %532 = vmatpush1.bf16.msra.mxu0 0
        %533 = vmatprep.subr.bf16.mxu0 0
        %534 = vmatpush1.bf16.msra.mxu0 0
        %535 = vmatprep.subr.bf16.mxu0 0
        %536 = vmatpush1.bf16.msra.mxu0 0
        %537 = vmatprep.subr.bf16.mxu0 0
        %538 = vmatpush1.bf16.msra.mxu0 0
        %539 = vmatprep.subr.bf16.mxu0 0
        %540 = vmatpush1.bf16.msra.mxu0 0
        %541 = vmatprep.subr.bf16.mxu0 0
        %542 = vmatpush1.bf16.msra.mxu0 0
        %543 = vmatprep.subr.bf16.mxu0 0
        %544 = vmatpush1.bf16.msra.mxu0 0
        %545 = vmatprep.subr.bf16.mxu0 0
        %546 = vmatpush1.bf16.msra.mxu0 0
        %547 = vmatprep.mubr.bf16.mxu0 0
        %548 = vmatmul.mubr.bf16.gmra.mrb[0].mxu0 %v436
        %v549 = vpop.f32.mrb[0].mxu0
        %v550 = vadd.f32 %v465, %v549
        %v551 = vpop.f32.mrb[0].mxu0
        %v552 = vpop.f32.mrb[0].mxu0
        %v553 = vadd.f32 %v465, %v552
        %v554 = vpop.f32.mrb[0].mxu0
        %555 = vmatprep.mubr.bf16.mxu0 0
        %556 = vmatmul.mubr.bf16.gmra.mrb[0].mxu0 %v437
        %v557 = vpop.f32.mrb[0].mxu0
        %v558 = vadd.f32 %v465, %v557
        %v559 = vpop.f32.mrb[0].mxu0
        %v560 = vpop.f32.mrb[0].mxu0
        %v561 = vadd.f32 %v465, %v560
        %v562 = vpop.f32.mrb[0].mxu0
        %563 = vmatprep.mubr.bf16.mxu0 0
        %564 = vmatmul.mubr.bf16.gmra.mrb[0].mxu0 %v438
        %v565 = vpop.f32.mrb[0].mxu0
        %v566 = vadd.f32 %v465, %v565
        %v567 = vpop.f32.mrb[0].mxu0
        %v568 = vpop.f32.mrb[0].mxu0
        %v569 = vadd.f32 %v465, %v568
        %v570 = vpop.f32.mrb[0].mxu0
        %571 = vmatprep.mubr.bf16.mxu0 0
        %572 = vmatmul.mubr.bf16.gmra.mrb[0].mxu0 %v439
        %v573 = vpop.f32.mrb[0].mxu0
        %v574 = vadd.f32 %v465, %v573
        %v575 = vpop.f32.mrb[0].mxu0
        %v576 = vpop.f32.mrb[0].mxu0
        %v577 = vadd.f32 %v465, %v576
        %v578 = vpop.f32.mrb[0].mxu0
        %579 = vmatprep.mubr.bf16.mxu0 0
        %580 = vmatmul.mubr.bf16.gmra.mrb[0].mxu0 %v440
        %v581 = vpop.f32.mrb[0].mxu0
        %v582 = vadd.f32 %v465, %v581
        %v583 = vpop.f32.mrb[0].mxu0
        %v584 = vpop.f32.mrb[0].mxu0
        %v585 = vadd.f32 %v465, %v584
        %v586 = vpop.f32.mrb[0].mxu0
        %587 = vmatprep.mubr.bf16.mxu0 0
        %588 = vmatmul.mubr.bf16.gmra.mrb[0].mxu0 %v441
        %v589 = vpop.f32.mrb[0].mxu0
        %v590 = vadd.f32 %v465, %v589
        %v591 = vpop.f32.mrb[0].mxu0
        %v592 = vpop.f32.mrb[0].mxu0
        %v593 = vadd.f32 %v465, %v592
        %v594 = vpop.f32.mrb[0].mxu0
        %595 = vmatprep.mubr.bf16.mxu0 0
        %596 = vmatmul.mubr.bf16.gmra.mrb[0].mxu0 %v442
        %v597 = vpop.f32.mrb[0].mxu0
        %v598 = vadd.f32 %v465, %v597
        %v599 = vpop.f32.mrb[0].mxu0
        %v600 = vpop.f32.mrb[0].mxu0
        %v601 = vadd.f32 %v465, %v600
        %v602 = vpop.f32.mrb[0].mxu0
        %603 = vmatprep.mubr.bf16.mxu0 0
        %604 = vmatmul.mubr.bf16.gmra.mrb[0].mxu0 %v443
        %v605 = vpop.f32.mrb[0].mxu0
        %v606 = vadd.f32 %v465, %v605
        %v607 = vpop.f32.mrb[0].mxu0
        %v608 = vpop.f32.mrb[0].mxu0
        %v609 = vadd.f32 %v465, %v608
        %v610 = vpop.f32.mrb[0].mxu0
        %611 = vdwg.mxu0
        %612 = vmax.xlane.f32.xlu0 %v550
        %v613 = vpop.xlane.xlu0 %612
        %614 = vmax.xlane.f32.xlu0 %v553
        %v615 = vpop.xlane.xlu0 %614
        %616 = vmax.xlane.f32.xlu0 %v558
        %v617 = vpop.xlane.xlu0 %616
        %618 = vmax.xlane.f32.xlu0 %v561
        %v619 = vpop.xlane.xlu0 %618
        %620 = vmax.xlane.f32.xlu0 %v566
        %v621 = vpop.xlane.xlu0 %620
        %622 = vmax.xlane.f32.xlu0 %v569
        %v623 = vpop.xlane.xlu0 %622
        %624 = vmax.xlane.f32.xlu0 %v574
        %v625 = vpop.xlane.xlu0 %624
        %626 = vmax.xlane.f32.xlu0 %v577
        %v627 = vpop.xlane.xlu0 %626
        %628 = vmax.xlane.f32.xlu0 %v582
        %v629 = vpop.xlane.xlu0 %628
        %630 = vmax.xlane.f32.xlu0 %v585
        %v631 = vpop.xlane.xlu0 %630
        %632 = vmax.xlane.f32.xlu0 %v590
        %v633 = vpop.xlane.xlu0 %632
        %634 = vmax.xlane.f32.xlu0 %v593
        %v635 = vpop.xlane.xlu0 %634
        %636 = vmax.xlane.f32.xlu0 %v598
        %v637 = vpop.xlane.xlu0 %636
        %638 = vmax.xlane.f32.xlu0 %v601
        %v639 = vpop.xlane.xlu0 %638
        %640 = vmax.xlane.f32.xlu0 %v606
        %v641 = vpop.xlane.xlu0 %640
        %642 = vmax.xlane.f32.xlu0 %v609
        %v643 = vpop.xlane.xlu0 %642
        %v644 = vsub.f32 %v550, %v613
        %v645 = vsub.f32 %v553, %v615
        %v646 = vsub.f32 %v558, %v617
        %v647 = vsub.f32 %v561, %v619
        %v648 = vsub.f32 %v566, %v621
        %v649 = vsub.f32 %v569, %v623
        %v650 = vsub.f32 %v574, %v625
        %v651 = vsub.f32 %v577, %v627
        %v652 = vsub.f32 %v582, %v629
        %v653 = vsub.f32 %v585, %v631
        %v654 = vsub.f32 %v590, %v633
        %v655 = vsub.f32 %v593, %v635
        %v656 = vsub.f32 %v598, %v637
        %v657 = vsub.f32 %v601, %v639
        %v658 = vsub.f32 %v606, %v641
        %v659 = vsub.f32 %v609, %v643
        %v660 = vmul.f32 %v644, 1.442695
        %v661 = vpow.pop %v660
        %v662 = vmul.f32 %v645, 1.442695
        %v663 = vpow.pop %v662
        %v664 = vmul.f32 %v646, 1.442695
        %v665 = vpow.pop %v664
        %v666 = vmul.f32 %v647, 1.442695
        %v667 = vpow.pop %v666
        %v668 = vmul.f32 %v648, 1.442695
        %v669 = vpow.pop %v668
        %v670 = vmul.f32 %v649, 1.442695
        %v671 = vpow.pop %v670
        %v672 = vmul.f32 %v650, 1.442695
        %v673 = vpow.pop %v672
        %v674 = vmul.f32 %v651, 1.442695
        %v675 = vpow.pop %v674
        %v676 = vmul.f32 %v652, 1.442695
        %v677 = vpow.pop %v676
        %v678 = vmul.f32 %v653, 1.442695
        %v679 = vpow.pop %v678
        %v680 = vmul.f32 %v654, 1.442695
        %v681 = vpow.pop %v680
        %v682 = vmul.f32 %v655, 1.442695
        %v683 = vpow.pop %v682
        %v684 = vmul.f32 %v656, 1.442695
        %v685 = vpow.pop %v684
        %v686 = vmul.f32 %v657, 1.442695
        %v687 = vpow.pop %v686
        %v688 = vmul.f32 %v658, 1.442695
        %v689 = vpow.pop %v688
        %v690 = vmul.f32 %v659, 1.442695
        %v691 = vpow.pop %v690
        %692 = vadd.xlane.f32.xlu0 %v661
        %v693 = vpop.xlane.xlu0 %692
        %694 = vadd.xlane.f32.xlu0 %v663
        %v695 = vpop.xlane.xlu0 %694
        %696 = vadd.xlane.f32.xlu0 %v665
        %v697 = vpop.xlane.xlu0 %696
        %698 = vadd.xlane.f32.xlu0 %v667
        %v699 = vpop.xlane.xlu0 %698
        %700 = vadd.xlane.f32.xlu0 %v669
        %v701 = vpop.xlane.xlu0 %700
        %702 = vadd.xlane.f32.xlu0 %v671
        %v703 = vpop.xlane.xlu0 %702
        %704 = vadd.xlane.f32.xlu0 %v673
        %v705 = vpop.xlane.xlu0 %704
        %706 = vadd.xlane.f32.xlu0 %v675
        %v707 = vpop.xlane.xlu0 %706
        %708 = vadd.xlane.f32.xlu0 %v677
        %v709 = vpop.xlane.xlu0 %708
        %710 = vadd.xlane.f32.xlu0 %v679
        %v711 = vpop.xlane.xlu0 %710
        %712 = vadd.xlane.f32.xlu0 %v681
        %v713 = vpop.xlane.xlu0 %712
        %714 = vadd.xlane.f32.xlu0 %v683
        %v715 = vpop.xlane.xlu0 %714
        %716 = vadd.xlane.f32.xlu0 %v685
        %v717 = vpop.xlane.xlu0 %716
        %718 = vadd.xlane.f32.xlu0 %v687
        %v719 = vpop.xlane.xlu0 %718
        %720 = vadd.xlane.f32.xlu0 %v689
        %v721 = vpop.xlane.xlu0 %720
        %722 = vadd.xlane.f32.xlu0 %v691
        %v723 = vpop.xlane.xlu0 %722
        %v724 = vrcp.pop %v693
        %v725 = vrcp.pop %v695
        %v726 = vrcp.pop %v697
        %v727 = vrcp.pop %v699
        %v728 = vrcp.pop %v701
        %v729 = vrcp.pop %v703
        %v730 = vrcp.pop %v705
        %v731 = vrcp.pop %v707
        %v732 = vrcp.pop %v709
        %v733 = vrcp.pop %v711
        %v734 = vrcp.pop %v713
        %v735 = vrcp.pop %v715
        %v736 = vrcp.pop %v717
        %v737 = vrcp.pop %v719
        %v738 = vrcp.pop %v721
        %v739 = vrcp.pop %v723
        %v740 = vmul.f32 %v661, %v724
        %v741 = vmul.f32 %v663, %v725
        %v742 = vmul.f32 %v665, %v726
        %v743 = vmul.f32 %v667, %v727
        %v744 = vmul.f32 %v669, %v728
        %v745 = vmul.f32 %v671, %v729
        %v746 = vmul.f32 %v673, %v730
        %v747 = vmul.f32 %v675, %v731
        %v748 = vmul.f32 %v677, %v732
        %v749 = vmul.f32 %v679, %v733
        %v750 = vmul.f32 %v681, %v734
        %v751 = vmul.f32 %v683, %v735
        %v752 = vmul.f32 %v685, %v736
        %v753 = vmul.f32 %v687, %v737
        %v754 = vmul.f32 %v689, %v738
        %v755 = vmul.f32 %v691, %v739
        %v756 = vpack.c.bf16 %v741, %v740
        %v757 = vpack.c.bf16 %v743, %v742
        %v758 = vpack.c.bf16 %v745, %v744
        %v759 = vpack.c.bf16 %v747, %v746
        %v760 = vpack.c.bf16 %v749, %v748
        %v761 = vpack.c.bf16 %v751, %v750
        %v762 = vpack.c.bf16 %v753, %v752
        %v763 = vpack.c.bf16 %v755, %v754
        %v772 = vunpack.c.l.b16 %v756
        %v773 = vunpack.c.h.b16 %v756
        %v774 = vunpack.c.l.b16 %v757
        %v775 = vunpack.c.h.b16 %v757
        %v776 = vunpack.c.l.b16 %v758
        %v777 = vunpack.c.h.b16 %v758
        %v778 = vunpack.c.l.b16 %v759
        %v779 = vunpack.c.h.b16 %v759
        %v780 = vunpack.c.l.b16 %v760
        %v781 = vunpack.c.h.b16 %v760
        %v782 = vunpack.c.l.b16 %v761
        %v783 = vunpack.c.h.b16 %v761
        %v784 = vunpack.c.l.b16 %v762
        %v785 = vunpack.c.h.b16 %v762
        %v786 = vunpack.c.l.b16 %v763
        %v787 = vunpack.c.h.b16 %v763
        %v788 = vpack.c.b16 %v772, %v772
        %v789 = vpack.c.b16 %v773, %v773
        %v790 = vpack.c.b16 %v774, %v774
        %v791 = vpack.c.b16 %v775, %v775
        %v792 = vpack.c.b16 %v776, %v776
        %v793 = vpack.c.b16 %v777, %v777
        %v794 = vpack.c.b16 %v778, %v778
        %v795 = vpack.c.b16 %v779, %v779
        %v796 = vpack.c.b16 %v780, %v780
        %v797 = vpack.c.b16 %v781, %v781
        %v798 = vpack.c.b16 %v782, %v782
        %v799 = vpack.c.b16 %v783, %v783
        %v800 = vpack.c.b16 %v784, %v784
        %v801 = vpack.c.b16 %v785, %v785
        %v802 = vpack.c.b16 %v786, %v786
        %v803 = vpack.c.b16 %v787, %v787
        %820 = vst [vmem:[%s218] sm:$0xf] %v788
        %821 = vst [vmem:[%s218 + $0x4] sm:$0xf] %v789
        %822 = vst [vmem:[%s218 + $0x8] sm:$0xf] %v790
        %823 = vst [vmem:[%s218 + $0xc] sm:$0xf] %v791
        %824 = vst [vmem:[%s218 + $0x10] sm:$0xf] %v792
        %825 = vst [vmem:[%s218 + $0x14] sm:$0xf] %v793
        %826 = vst [vmem:[%s218 + $0x18] sm:$0xf] %v794
        %827 = vst [vmem:[%s218 + $0x1c] sm:$0xf] %v795
        %828 = vst [vmem:[%s218 + $0x20] sm:$0xf] %v796
        %829 = vst [vmem:[%s218 + $0x24] sm:$0xf] %v797
        %830 = vst [vmem:[%s218 + $0x28] sm:$0xf] %v798
        %831 = vst [vmem:[%s218 + $0x2c] sm:$0xf] %v799
        %832 = vst [vmem:[%s218 + $0x30] sm:$0xf] %v800
        %833 = vst [vmem:[%s218 + $0x34] sm:$0xf] %v801
        %834 = vst [vmem:[%s218 + $0x38] sm:$0xf] %v802
        %835 = vst [vmem:[%s218 + $0x3c] sm:$0xf] %v803
        %s836 = sand.u32 %s137, 1
        %s837 = scalar_lea.sflag [#allocation3], %s836
        %s838 = sand.u32 %s137, 1
        %s839 = smul.addr %s838, 64
        %s840 = scalar_lea.vmem [#allocation2], %s839
        // Predicated region
        $region41: #{tpu_custom_call.1} parent=39 // pred_check
          %p841 = pneg %p147
        $region42: #{tpu_custom_call.1} parent=39 // pred_check_branch
          %843 = sbr.rel (%p841) target = $region44
        $region43: #{tpu_custom_call.1} parent=39 // pred_region
          %s844 = smul.u32 16, %s19
          %s846 = ssub.s32 1024, 1024
          %847 = vsyncadd %s837, %s846
          %s848 = smul.addr %s844, 64
          %s849 = scalar_lea.hbm %s5, %s848
          %s850 = sshll.u32 %s840, 4
          %s851 = int_to_ptr.vmem [resolvable:$true] %s850
          %856 = dma.vmem_to_hbm [thread:$0]  %s851, 1024, %s849, %s837, 64, 64, 4
        $region44: #{tpu_custom_call.1} parent=39 // pred_fallthru
          _
      $region40: #{tpu_custom_call.1} parent=5 // pred_fallthru
        _
      %p857 = scmp.le.s32.totalorder 2, %s14
      // Predicated region
      $region45: #{tpu_custom_call.1} parent=5 // pred_check
        %p858 = pneg %p857
      $region46: #{tpu_custom_call.1} parent=5 // pred_check_branch
        %860 = sbr.rel (%p858) target = $region48
      $region47: #{tpu_custom_call.1} parent=5 // pred_region
        %s861 = ssub.s32 %s14, 2
        // Predicated region
        $region49: #{tpu_custom_call.1} parent=47 // pred_check
          %p862 = pneg %p153
        $region50: #{tpu_custom_call.1} parent=47 // pred_check_branch
          %864 = sbr.rel (%p862) target = $region52
        $region51: #{tpu_custom_call.1} parent=47 // pred_region
          %s865 = sand.u32 %s138, 1
          %s866 = scalar_lea.sflag [#allocation3], %s865
          %s867 = sand.u32 %s138, 1
          %s868 = smul.addr %s867, 64
          %s869 = scalar_lea.vmem [#allocation2], %s868
          %870 = dma.done %s866, 1024
        $region52: #{tpu_custom_call.1} parent=47 // pred_fallthru
          _
      $region48: #{tpu_custom_call.1} parent=5 // pred_fallthru
        _
    $region6: #{tpu_custom_call.1} parent=1 // loop_footer
      %s18 = sadd.s32 1, %s14
    $region7: #{tpu_custom_call.1} parent=1 // loop_footer_branch
      %13 = sbr.rel target = $region3
    $region8: #{tpu_custom_call.1} parent=1 // loop_exit
      _
    %871 = vsyncpa [#allocation3], 1
    %s872 = scalar_lea.sflag [#allocation3], 1
    %873 = vsyncpa %s872, 1

</llo_original>
